<compile_context>
chip_gen: v7x
topology: tpu7x:2x2x1
jax: 0.10.0
libtpu: 0.0.40
codegen_flags: <defaults>
</compile_context>

<pallas_src>
import functools

import jax
import jax.numpy as jnp
from jax.experimental import pallas as pl
from jax.experimental.pallas import tpu as pltpu


# ----------------------------------------------------------------------------
# Fused PointCN kernel: one grid step == one batch sample.
# ----------------------------------------------------------------------------
def _pointcn_kernel(*refs, eps_in, has_sc_conv, use_short_cut):
    if has_sc_conv:
        (x_ref, w1_ref, w2_ref, bn1s_ref, bn1b_ref, bn2s_ref, bn2b_ref,
         b2_ref, wsc_ref, o_ref) = refs
    else:
        (x_ref, w1_ref, w2_ref, bn1s_ref, bn1b_ref, bn2s_ref, bn2b_ref,
         b2_ref, o_ref) = refs
        wsc_ref = None

    x = x_ref[0]                                        # (N, C_in) f32

    # ---- InstanceNorm(channels) + folded BatchNorm1 + ReLU ------------------
    mu1 = jnp.mean(x, axis=0, keepdims=True)            # (1, C_in)
    xc = x - mu1
    var1 = jnp.mean(xc * xc, axis=0, keepdims=True)
    scale1 = jax.lax.rsqrt(var1 + eps_in) * bn1s_ref[...]
    h = jnp.maximum(xc * scale1 + bn1b_ref[...], 0.0)

    # ---- Conv1x1 #1 (bias omitted: exactly cancelled by next InstanceNorm) --
    h1 = jnp.dot(h, w1_ref[...], preferred_element_type=jnp.float32)  # (N, C_out)

    # ---- InstanceNorm(out_channels) + folded BatchNorm2 + ReLU --------------
    mu2 = jnp.mean(h1, axis=0, keepdims=True)
    hc = h1 - mu2
    var2 = jnp.mean(hc * hc, axis=0, keepdims=True)
    scale2 = jax.lax.rsqrt(var2 + eps_in) * bn2s_ref[...]
    g = jnp.maximum(hc * scale2 + bn2b_ref[...], 0.0)

    # ---- Conv1x1 #2 + (combined) bias ----------------------------------------
    out = jnp.dot(g, w2_ref[...], preferred_element_type=jnp.float32)
    out = out + b2_ref[...]

    # ---- residual shortcut ----------------------------------------------------
    if use_short_cut:
        if has_sc_conv:
            out = out + jnp.dot(x, wsc_ref[...],
                                preferred_element_type=jnp.float32)
        else:
            out = out + x

    o_ref[0] = out.astype(o_ref.dtype)


def pointcn_forward(x_bnc, w1_t, w2_t, bn1s, bn1b, bn2s, bn2b, b2_row,
                    wsc_t=None, *, use_short_cut=True, eps_in=1e-3):
    """x_bnc: (B, N, C_in).  Weights are pre-transposed to (C_in, C_out).

    b2_row already includes the shortcut-conv bias when wsc_t is given.
    """
    B, N, C_in = x_bnc.shape
    C_out = w1_t.shape[1]
    has_sc_conv = wsc_t is not None

    kern = functools.partial(_pointcn_kernel, eps_in=eps_in,
                             has_sc_conv=has_sc_conv,
                             use_short_cut=use_short_cut)

    in_specs = [
        pl.BlockSpec((1, N, C_in), lambda b: (b, 0, 0)),     # full sample block
        pl.BlockSpec((C_in, C_out), lambda b: (0, 0)),       # W1^T
        pl.BlockSpec((C_out, C_out), lambda b: (0, 0)),      # W2^T
        pl.BlockSpec((1, C_in), lambda b: (0, 0)),           # folded BN1 scale
        pl.BlockSpec((1, C_in), lambda b: (0, 0)),           # folded BN1 shift
        pl.BlockSpec((1, C_out), lambda b: (0, 0)),          # folded BN2 scale
        pl.BlockSpec((1, C_out), lambda b: (0, 0)),          # folded BN2 shift
        pl.BlockSpec((1, C_out), lambda b: (0, 0)),          # conv2 (+sc) bias
    ]
    args = [x_bnc, w1_t, w2_t, bn1s, bn1b, bn2s, bn2b, b2_row]
    if has_sc_conv:
        in_specs += [pl.BlockSpec((C_in, C_out), lambda b: (0, 0))]
        args += [wsc_t]

    # Rough VMEM budget: double-buffered input/output blocks + weights +
    # a few live (N, C) intermediates.  Clamp so it stays safe on v7x (64 MiB).
    bytes_needed = 4 * (2 * N * C_in + 2 * N * C_out
                        + 4 * N * max(C_in, C_out)
                        + C_in * C_out + C_out * C_out + 8 * C_out)
    vmem_limit = int(min(max(2 * bytes_needed, 16 * 1024 * 1024),
                         48 * 1024 * 1024))

    return pl.pallas_call(
        kern,
        out_shape=jax.ShapeDtypeStruct((B, N, C_out), jnp.float32),
        grid_spec=pltpu.PrefetchScalarGridSpec(
            num_scalar_prefetch=0,
            grid=(B,),
            in_specs=in_specs,
            out_specs=pl.BlockSpec((1, N, C_out), lambda b: (b, 0, 0)),
        ),
        compiler_params=pltpu.CompilerParams(
            dimension_semantics=("parallel",),
            vmem_limit_bytes=vmem_limit),
    )(*args)


# ----------------------------------------------------------------------------
# Module wrapper (parameter setup + layout glue in plain JAX)
# ----------------------------------------------------------------------------
class PointCNPallas:
    def __init__(self, channels, out_channels=None, use_bn=True,
                 use_short_cut=True, key=jax.random.PRNGKey(42)):
        if not out_channels:
            out_channels = channels
        self.channels = channels
        self.out_channels = out_channels
        self.use_bn = use_bn
        self.use_short_cut = use_short_cut
        self.has_sc_conv = use_short_cut and (out_channels != channels)

        k1, k2, k3, k4, k5, k6 = jax.random.split(key, 6)
        # nn.Conv2d(channels, out_channels, 1): weight (out, in), bias (out,)
        self.w1 = 0.1 * jax.random.normal(k1, (out_channels, channels), jnp.float32)
        self.b1 = 0.1 * jax.random.normal(k2, (out_channels,), jnp.float32)
        # nn.Conv2d(out_channels, out_channels, 1)
        self.w2 = 0.1 * jax.random.normal(k3, (out_channels, out_channels), jnp.float32)
        self.b2 = 0.1 * jax.random.normal(k4, (out_channels,), jnp.float32)
        if self.has_sc_conv:
            self.w_sc = 0.1 * jax.random.normal(k5, (out_channels, channels), jnp.float32)
            self.b_sc = 0.1 * jax.random.normal(k6, (out_channels,), jnp.float32)

        # BatchNorm2d params (eval mode, running stats), folded to scale/shift.
        eps_bn = 1e-5
        if use_bn:
            c, o = channels, out_channels
            self.g1 = 1.0 + 0.01 * jnp.arange(c, dtype=jnp.float32)
            self.be1 = 0.02 * jnp.arange(c, dtype=jnp.float32)
            self.rm1 = 0.05 * jnp.sin(jnp.arange(c, dtype=jnp.float32))
            self.rv1 = 1.0 + 0.03 * jnp.arange(c, dtype=jnp.float32)
            self.g2 = 1.0 - 0.005 * jnp.arange(o, dtype=jnp.float32)
            self.be2 = -0.01 * jnp.arange(o, dtype=jnp.float32)
            self.rm2 = 0.03 * jnp.cos(jnp.arange(o, dtype=jnp.float32))
            self.rv2 = 1.0 + 0.02 * jnp.arange(o, dtype=jnp.float32)
            s1 = self.g1 / jnp.sqrt(self.rv1 + eps_bn)
            s2 = self.g2 / jnp.sqrt(self.rv2 + eps_bn)
            self.bn1_scale, self.bn1_shift = s1, self.be1 - self.rm1 * s1
            self.bn2_scale, self.bn2_shift = s2, self.be2 - self.rm2 * s2
        else:
            self.bn1_scale = jnp.ones((channels,), jnp.float32)
            self.bn1_shift = jnp.zeros((channels,), jnp.float32)
            self.bn2_scale = jnp.ones((out_channels,), jnp.float32)
            self.bn2_shift = jnp.zeros((out_channels,), jnp.float32)

    def __call__(self, x_nchw):
        """x_nchw: (B, C, N, 1) float32 -> (B, C_out, N, 1)."""
        B, C, N, W = x_nchw.shape
        assert C == self.channels and W == 1
        x_bnc = jnp.transpose(x_nchw[..., 0], (0, 2, 1))          # (B, N, C)

        if self.has_sc_conv:
            wsc_t = jnp.transpose(self.w_sc)                      # (C_in, C_out)
            b2_combined = self.b2 + self.b_sc                     # fold both biases
        else:
            wsc_t = None
            b2_combined = self.b2

        out_bnc = pointcn_forward(
            x_bnc,
            jnp.transpose(self.w1),                               # (C_in, C_out)
            jnp.transpose(self.w2),                               # (C_out, C_out)
            self.bn1_scale.reshape(1, -1), self.bn1_shift.reshape(1, -1),
            self.bn2_scale.reshape(1, -1), self.bn2_shift.reshape(1, -1),
            b2_combined.reshape(1, -1),
            wsc_t,
            use_short_cut=self.use_short_cut)

        # back to PyTorch layout (B, C_out, N, 1)
        return jnp.transpose(out_bnc, (0, 2, 1))[..., None]


# ----------------------------------------------------------------------------
# Pure-JAX reference (faithful to the PyTorch module, eval-mode BN)
# ----------------------------------------------------------------------------
def reference(mod, x_nchw):
    x = x_nchw[..., 0]                                            # (B, C, N)

    def inorm(t, eps):
        mu = jnp.mean(t, axis=2, keepdims=True)
        var = jnp.mean((t - mu) ** 2, axis=2, keepdims=True)
        return (t - mu) / jnp.sqrt(var + eps)

    def bnorm(t, gamma, beta, rm, rv, eps):
        return ((t - rm[None, :, None]) / jnp.sqrt(rv[None, :, None] + eps)
                * gamma[None, :, None] + beta[None, :, None])

    h = inorm(x, 1e-3)
    if mod.use_bn:
        h = bnorm(h, mod.g1, mod.be1, mod.rm1, mod.rv1, 1e-5)
    h = jnp.maximum(h, 0.0)
    h = jnp.einsum('bcn,oc->bon', h, mod.w1) + mod.b1[None, :, None]
    h = inorm(h, 1e-3)
    if mod.use_bn:
        h = bnorm(h, mod.g2, mod.be2, mod.rm2, mod.rv2, 1e-5)
    h = jnp.maximum(h, 0.0)
    out = jnp.einsum('bcn,oc->bon', h, mod.w2) + mod.b2[None, :, None]
    if mod.use_short_cut:
        if mod.has_sc_conv:
            out = out + jnp.einsum('bcn,oc->bon', x, mod.w_sc) + mod.b_sc[None, :, None]
        else:
            out = out + x
    return out[..., None]                                         # (B, C_out, N, 1)


if __name__ == "__main__":
    key = jax.random.PRNGKey(0)
    kx, km1, km2 = jax.random.split(key, 3)

    B, C, N = 2, 32, 128
    x = jax.random.normal(kx, (B, C, N, 1), jnp.float32)          # NCHW, W=1

    # Config 1: identity shortcut (out_channels == channels), BN on.
    mod1 = PointCNPallas(C, out_channels=C, use_bn=True, use_short_cut=True,
                         key=km1)
    out1 = jax.block_until_ready(mod1(x))
    ref1 = reference(mod1, x)
    assert out1.shape == (B, C, N, 1), out1.shape
    err1 = float(jnp.max(jnp.abs(out1 - ref1)))
    assert jnp.allclose(out1, ref1, atol=2e-4, rtol=2e-3), err1

    # Config 2: 1x1-conv shortcut (out_channels != channels), BN off.
    C_out = 64
    mod2 = PointCNPallas(C, out_channels=C_out, use_bn=False,
                         use_short_cut=True, key=km2)
    out2 = jax.block_until_ready(mod2(x))
    ref2 = reference(mod2, x)
    assert out2.shape == (B, C_out, N, 1), out2.shape
    err2 = float(jnp.max(jnp.abs(out2 - ref2)))
    assert jnp.allclose(out2, ref2, atol=2e-4, rtol=2e-3), err2

    print("KERNEL_OK")
</pallas_src>

<mosaic_0001>
module attributes {stable_mosaic.version = 11 : i64} {
  func.func @_pointcn_kernel(%arg0: i32, %arg1: memref<1x128x32xf32, #tpu.memory_space<vmem>>, %arg2: memref<32x32xf32, #tpu.memory_space<vmem>>, %arg3: memref<32x32xf32, #tpu.memory_space<vmem>>, %arg4: memref<1x32xf32, #tpu.memory_space<vmem>>, %arg5: memref<1x32xf32, #tpu.memory_space<vmem>>, %arg6: memref<1x32xf32, #tpu.memory_space<vmem>>, %arg7: memref<1x32xf32, #tpu.memory_space<vmem>>, %arg8: memref<1x32xf32, #tpu.memory_space<vmem>>, %arg9: memref<1x128x32xf32, #tpu.memory_space<vmem>>) attributes {dimension_semantics = [#tpu.dimension_semantics<parallel>], iteration_bounds = array<i64: 2>, scalar_prefetch = 0 : i64, scratch_operands = 0 : i64, tpu.core_type = #tpu.core_type<tc>, window_params = [{transform_indices = @transform_0, window_bounds = array<i64: 1, 128, 32>}, {pipeline_mode = #tpu.pipeline_mode<synchronous>, transform_indices = @transform_1, window_bounds = array<i64: 32, 32>}, {pipeline_mode = #tpu.pipeline_mode<synchronous>, transform_indices = @transform_2, window_bounds = array<i64: 32, 32>}, {pipeline_mode = #tpu.pipeline_mode<synchronous>, transform_indices = @transform_3, window_bounds = array<i64: 1, 32>}, {pipeline_mode = #tpu.pipeline_mode<synchronous>, transform_indices = @transform_4, window_bounds = array<i64: 1, 32>}, {pipeline_mode = #tpu.pipeline_mode<synchronous>, transform_indices = @transform_5, window_bounds = array<i64: 1, 32>}, {pipeline_mode = #tpu.pipeline_mode<synchronous>, transform_indices = @transform_6, window_bounds = array<i64: 1, 32>}, {pipeline_mode = #tpu.pipeline_mode<synchronous>, transform_indices = @transform_7, window_bounds = array<i64: 1, 32>}, {transform_indices = @transform_8, window_bounds = array<i64: 1, 128, 32>}]} {
    %c0 = arith.constant 0 : index
    %c0_0 = arith.constant 0 : index
    %c0_1 = arith.constant 0 : index
    %0 = vector.load %arg1[%c0, %c0_0, %c0_1] : memref<1x128x32xf32, #tpu.memory_space<vmem>>, vector<1x128x32xf32>
    %1 = vector.shape_cast %0 : vector<1x128x32xf32> to vector<128x32xf32>
    %cst = arith.constant dense<0.000000e+00> : vector<32xf32>
    %2 = vector.multi_reduction <add>, %1, %cst [0] : vector<128x32xf32> to vector<32xf32>
    %3 = vector.shape_cast %2 : vector<32xf32> to vector<1x32xf32>
    %cst_2 = arith.constant 1.280000e+02 : f32
    %4 = vector.broadcast %cst_2 : f32 to vector<1x32xf32>
    %5 = arith.divf %3, %4 : vector<1x32xf32>
    %6 = vector.broadcast %5 : vector<1x32xf32> to vector<128x32xf32>
    %7 = arith.subf %1, %6 : vector<128x32xf32>
    %8 = arith.mulf %7, %7 : vector<128x32xf32>
    %cst_3 = arith.constant dense<0.000000e+00> : vector<32xf32>
    %9 = vector.multi_reduction <add>, %8, %cst_3 [0] : vector<128x32xf32> to vector<32xf32>
    %10 = vector.shape_cast %9 : vector<32xf32> to vector<1x32xf32>
    %cst_4 = arith.constant 1.280000e+02 : f32
    %11 = vector.broadcast %cst_4 : f32 to vector<1x32xf32>
    %12 = arith.divf %10, %11 : vector<1x32xf32>
    %cst_5 = arith.constant 1.000000e-03 : f32
    %13 = vector.broadcast %cst_5 : f32 to vector<1x32xf32>
    %14 = arith.addf %12, %13 : vector<1x32xf32>
    %15 = math.rsqrt %14 : vector<1x32xf32>
    %c0_6 = arith.constant 0 : index
    %c0_7 = arith.constant 0 : index
    %16 = vector.load %arg4[%c0_6, %c0_7] : memref<1x32xf32, #tpu.memory_space<vmem>>, vector<1x32xf32>
    %17 = arith.mulf %15, %16 : vector<1x32xf32>
    %18 = vector.broadcast %17 : vector<1x32xf32> to vector<128x32xf32>
    %19 = arith.mulf %7, %18 : vector<128x32xf32>
    %c0_8 = arith.constant 0 : index
    %c0_9 = arith.constant 0 : index
    %20 = vector.load %arg5[%c0_8, %c0_9] : memref<1x32xf32, #tpu.memory_space<vmem>>, vector<1x32xf32>
    %21 = vector.broadcast %20 : vector<1x32xf32> to vector<128x32xf32>
    %22 = arith.addf %19, %21 : vector<128x32xf32>
    %cst_10 = arith.constant 0.000000e+00 : f32
    %23 = vector.broadcast %cst_10 : f32 to vector<128x32xf32>
    %24 = arith.maximumf %22, %23 : vector<128x32xf32>
    %c0_11 = arith.constant 0 : index
    %c0_12 = arith.constant 0 : index
    %25 = vector.load %arg2[%c0_11, %c0_12] : memref<32x32xf32, #tpu.memory_space<vmem>>, vector<32x32xf32>
    %cst_13 = arith.constant dense<0.000000e+00> : vector<128x32xf32>
    %26 = tpu.matmul %24, %25, %cst_13 {dimension_numbers = #tpu.dot_dimension_numbers<[1], [0], [0], [1], [0, 0, 1, 1], [], []>} : vector<128x32xf32>, vector<32x32xf32>, vector<128x32xf32> -> vector<128x32xf32>
    %cst_14 = arith.constant dense<0.000000e+00> : vector<32xf32>
    %27 = vector.multi_reduction <add>, %26, %cst_14 [0] : vector<128x32xf32> to vector<32xf32>
    %28 = vector.shape_cast %27 : vector<32xf32> to vector<1x32xf32>
    %cst_15 = arith.constant 1.280000e+02 : f32
    %29 = vector.broadcast %cst_15 : f32 to vector<1x32xf32>
    %30 = arith.divf %28, %29 : vector<1x32xf32>
    %31 = vector.broadcast %30 : vector<1x32xf32> to vector<128x32xf32>
    %32 = arith.subf %26, %31 : vector<128x32xf32>
    %33 = arith.mulf %32, %32 : vector<128x32xf32>
    %cst_16 = arith.constant dense<0.000000e+00> : vector<32xf32>
    %34 = vector.multi_reduction <add>, %33, %cst_16 [0] : vector<128x32xf32> to vector<32xf32>
    %35 = vector.shape_cast %34 : vector<32xf32> to vector<1x32xf32>
    %cst_17 = arith.constant 1.280000e+02 : f32
    %36 = vector.broadcast %cst_17 : f32 to vector<1x32xf32>
    %37 = arith.divf %35, %36 : vector<1x32xf32>
    %cst_18 = arith.constant 1.000000e-03 : f32
    %38 = vector.broadcast %cst_18 : f32 to vector<1x32xf32>
    %39 = arith.addf %37, %38 : vector<1x32xf32>
    %40 = math.rsqrt %39 : vector<1x32xf32>
    %c0_19 = arith.constant 0 : index
    %c0_20 = arith.constant 0 : index
    %41 = vector.load %arg6[%c0_19, %c0_20] : memref<1x32xf32, #tpu.memory_space<vmem>>, vector<1x32xf32>
    %42 = arith.mulf %40, %41 : vector<1x32xf32>
    %43 = vector.broadcast %42 : vector<1x32xf32> to vector<128x32xf32>
    %44 = arith.mulf %32, %43 : vector<128x32xf32>
    %c0_21 = arith.constant 0 : index
    %c0_22 = arith.constant 0 : index
    %45 = vector.load %arg7[%c0_21, %c0_22] : memref<1x32xf32, #tpu.memory_space<vmem>>, vector<1x32xf32>
    %46 = vector.broadcast %45 : vector<1x32xf32> to vector<128x32xf32>
    %47 = arith.addf %44, %46 : vector<128x32xf32>
    %cst_23 = arith.constant 0.000000e+00 : f32
    %48 = vector.broadcast %cst_23 : f32 to vector<128x32xf32>
    %49 = arith.maximumf %47, %48 : vector<128x32xf32>
    %c0_24 = arith.constant 0 : index
    %c0_25 = arith.constant 0 : index
    %50 = vector.load %arg3[%c0_24, %c0_25] : memref<32x32xf32, #tpu.memory_space<vmem>>, vector<32x32xf32>
    %cst_26 = arith.constant dense<0.000000e+00> : vector<128x32xf32>
    %51 = tpu.matmul %49, %50, %cst_26 {dimension_numbers = #tpu.dot_dimension_numbers<[1], [0], [0], [1], [0, 0, 1, 1], [], []>} : vector<128x32xf32>, vector<32x32xf32>, vector<128x32xf32> -> vector<128x32xf32>
    %c0_27 = arith.constant 0 : index
    %c0_28 = arith.constant 0 : index
    %52 = vector.load %arg8[%c0_27, %c0_28] : memref<1x32xf32, #tpu.memory_space<vmem>>, vector<1x32xf32>
    %53 = vector.broadcast %52 : vector<1x32xf32> to vector<128x32xf32>
    %54 = arith.addf %51, %53 : vector<128x32xf32>
    %55 = arith.addf %54, %1 : vector<128x32xf32>
    %c0_29 = arith.constant 0 : index
    %c0_30 = arith.constant 0 : index
    %c0_31 = arith.constant 0 : index
    %56 = vector.load %arg9[%c0_29, %c0_30, %c0_31] : memref<1x128x32xf32, #tpu.memory_space<vmem>>, vector<1x128x32xf32>
    %57 = vector.shape_cast %56 : vector<1x128x32xf32> to vector<128x32xf32>
    %58 = vector.shape_cast %55 : vector<128x32xf32> to vector<1x128x32xf32>
    tpu.vector_store %arg9[%c0_29, %c0_30, %c0_31], %58 {strides = array<i32>} : memref<1x128x32xf32, #tpu.memory_space<vmem>>, vector<1x128x32xf32>,
    return
  }
  func.func @transform_0(%arg0: i32) -> (i32, i32, i32) {
    %c0_i32 = arith.constant 0 : i32
    %c0_i32_0 = arith.constant 0 : i32
    %c0_i32_1 = arith.constant 0 : i32
    return %arg0, %c0_i32, %c0_i32_0 : i32, i32, i32
  }
  func.func @transform_1(%arg0: i32) -> (i32, i32) {
    %c0_i32 = arith.constant 0 : i32
    %c0_i32_0 = arith.constant 0 : i32
    %c0_i32_1 = arith.constant 0 : i32
    return %c0_i32, %c0_i32_0 : i32, i32
  }
  func.func @transform_2(%arg0: i32) -> (i32, i32) {
    %c0_i32 = arith.constant 0 : i32
    %c0_i32_0 = arith.constant 0 : i32
    %c0_i32_1 = arith.constant 0 : i32
    return %c0_i32, %c0_i32_0 : i32, i32
  }
  func.func @transform_3(%arg0: i32) -> (i32, i32) {
    %c0_i32 = arith.constant 0 : i32
    %c0_i32_0 = arith.constant 0 : i32
    %c0_i32_1 = arith.constant 0 : i32
    return %c0_i32, %c0_i32_0 : i32, i32
  }
  func.func @transform_4(%arg0: i32) -> (i32, i32) {
    %c0_i32 = arith.constant 0 : i32
    %c0_i32_0 = arith.constant 0 : i32
    %c0_i32_1 = arith.constant 0 : i32
    return %c0_i32, %c0_i32_0 : i32, i32
  }
  func.func @transform_5(%arg0: i32) -> (i32, i32) {
    %c0_i32 = arith.constant 0 : i32
    %c0_i32_0 = arith.constant 0 : i32
    %c0_i32_1 = arith.constant 0 : i32
    return %c0_i32, %c0_i32_0 : i32, i32
  }
  func.func @transform_6(%arg0: i32) -> (i32, i32) {
    %c0_i32 = arith.constant 0 : i32
    %c0_i32_0 = arith.constant 0 : i32
    %c0_i32_1 = arith.constant 0 : i32
    return %c0_i32, %c0_i32_0 : i32, i32
  }
  func.func @transform_7(%arg0: i32) -> (i32, i32) {
    %c0_i32 = arith.constant 0 : i32
    %c0_i32_0 = arith.constant 0 : i32
    %c0_i32_1 = arith.constant 0 : i32
    return %c0_i32, %c0_i32_0 : i32, i32
  }
  func.func @transform_8(%arg0: i32) -> (i32, i32, i32) {
    %c0_i32 = arith.constant 0 : i32
    %c0_i32_0 = arith.constant 0 : i32
    %c0_i32_1 = arith.constant 0 : i32
    return %arg0, %c0_i32, %c0_i32_0 : i32, i32, i32
  }
}

</mosaic_0001>

<llo_original>
// kernel: tpu_custom_call.1
$region0: #{tpu_custom_call.1}
  #allocation0 [shape = 'u32[]', space=smem, size = 0x4, offset = 0x4, fixed_abs, tag = 'smem constant byte address 0x4 - core index']
  #allocation1 [shape = 'u32[144,128]{1,0:T(1,128)}', space=vmem, size = 0x12000, scoped, tag = 'internal scratch']
  %s0 = inlined_call_operand.vmem [shape: f32[2,128,32], index: 0, kind: input, shape index: {}]
  %s1 = inlined_call_operand.vmem [shape: f32[32,32], index: 1, kind: input, shape index: {}]
  %s2 = inlined_call_operand.vmem [shape: f32[32,32], index: 2, kind: input, shape index: {}]
  %s3 = inlined_call_operand.vmem [shape: f32[1,32], index: 3, kind: input, shape index: {}]
  %s4 = inlined_call_operand.vmem [shape: f32[1,32], index: 4, kind: input, shape index: {}]
  %s5 = inlined_call_operand.vmem [shape: f32[1,32], index: 5, kind: input, shape index: {}]
  %s6 = inlined_call_operand.vmem [shape: f32[1,32], index: 6, kind: input, shape index: {}]
  %s7 = inlined_call_operand.vmem [shape: f32[1,32], index: 7, kind: input, shape index: {}]
  %s8 = inlined_call_operand.vmem [shape: f32[2,128,32], index: 8, kind: output, shape index: {}]
  %s9 = sld [smem:[#allocation0]]
  $region65: #{tpu_custom_call.1} parent=0
    _
  %s11 = ssub.s32 1, %s9
  %s12 = scalar_select 0, %s11, %s9
  loop: start=0, step=1, limit=4
  $region2: #{tpu_custom_call.1} parent=0 // loop_pre_header
    _
  $region3: #{tpu_custom_call.1} parent=0 // loop_header
    %s14 = sphi 0, %s18
    %p15 = scmp.ge.s32.totalorder %s14, 4
    %s24 = sphi 0, %s26
    %s27 = sphi 0, %s24
    %s28 = sphi 0, %s27
    %s44 = sphi 0, %s28
    %s48 = sphi 0, %s48
    %s50 = sphi 0, %s48
    %s51 = sphi 0, %s50
    %s65 = sphi 0, %s51
    %s69 = sphi 0, %s69
    %s71 = sphi 0, %s69
    %s72 = sphi 0, %s71
    %s86 = sphi 0, %s72
    %s90 = sphi 0, %s90
    %s92 = sphi 0, %s90
    %s93 = sphi 0, %s92
    %s107 = sphi 0, %s93
    %s111 = sphi 0, %s111
    %s113 = sphi 0, %s111
    %s114 = sphi 0, %s113
    %s128 = sphi 0, %s114
    %s132 = sphi 0, %s132
    %s134 = sphi 0, %s132
    %s135 = sphi 0, %s134
    %s149 = sphi 0, %s135
    %s153 = sphi 0, %s153
    %s155 = sphi 0, %s153
    %s156 = sphi 0, %s155
    %s170 = sphi 0, %s156
    %s174 = sphi 0, %s174
    %s176 = sphi 0, %s174
    %s177 = sphi 0, %s176
    %s191 = sphi 0, %s177
    %s197 = sphi 0, %s199
    %s200 = sphi 0, %s197
    %s201 = sphi 0, %s200
    %s217 = sphi 0, %s201
  $region4: #{tpu_custom_call.1} parent=0 // loop_header_branch
    %17 = sbr.rel (%p15) target = $region8
  $region5: #{tpu_custom_call.1} parent=0 // loop_body
    %s19 = ssub.s32 %s14, 1
    %s20 = ssub.s32 %s14, 2
    %s21 = sadd.s32 %s14, 1
    %s22 = ssub.s32 %s14, %s21
    %p23 = scmp.eq.s32.totalorder %s22, 0
    %s25 = sadd.s32 %s24, 1
    %s26 = scalar_select %p23, %s24, %s25
    %p29 = pneg %p23
    %p30 = scmp.eq.s32.totalorder %s14, 1
    %p31 = por %p29, %p30
    %p32 = scmp.ne.s32.totalorder %s24, %s27
    %p33 = scmp.eq.s32.totalorder %s14, 0
    %p34 = por %p32, %p33
    %p35 = scmp.ne.s32.totalorder %s24, %s27
    %p36 = scmp.eq.s32.totalorder %s19, 1
    %p37 = por %p35, %p36
    %p38 = scmp.ne.s32.totalorder %s27, %s28
    %p39 = scmp.eq.s32.totalorder %s19, 0
    %p40 = por %p38, %p39
    %p41 = scmp.ne.s32.totalorder %s27, %s28
    %p42 = scmp.eq.s32.totalorder %s20, 1
    %p43 = por %p41, %p42
    %p45 = scmp.ne.s32.totalorder %s28, %s44
    %p46 = scmp.eq.s32.totalorder %s20, 0
    %p47 = por %p45, %p46
    %s49 = sadd.s32 %s48, 1
    %p52 = scmp.eq.s32.totalorder %s14, 1
    %p53 = scmp.ne.s32.totalorder %s48, %s50
    %p54 = scmp.eq.s32.totalorder %s14, 0
    %p55 = por %p53, %p54
    %p56 = scmp.ne.s32.totalorder %s48, %s50
    %p57 = scmp.eq.s32.totalorder %s19, 1
    %p58 = por %p56, %p57
    %p59 = scmp.ne.s32.totalorder %s50, %s51
    %p60 = scmp.eq.s32.totalorder %s19, 0
    %p61 = por %p59, %p60
    %p62 = scmp.ne.s32.totalorder %s50, %s51
    %p63 = scmp.eq.s32.totalorder %s20, 1
    %p64 = por %p62, %p63
    %p66 = scmp.ne.s32.totalorder %s51, %s65
    %p67 = scmp.eq.s32.totalorder %s20, 0
    %p68 = por %p66, %p67
    %s70 = sadd.s32 %s69, 1
    %p73 = scmp.eq.s32.totalorder %s14, 1
    %p74 = scmp.ne.s32.totalorder %s69, %s71
    %p75 = scmp.eq.s32.totalorder %s14, 0
    %p76 = por %p74, %p75
    %p77 = scmp.ne.s32.totalorder %s69, %s71
    %p78 = scmp.eq.s32.totalorder %s19, 1
    %p79 = por %p77, %p78
    %p80 = scmp.ne.s32.totalorder %s71, %s72
    %p81 = scmp.eq.s32.totalorder %s19, 0
    %p82 = por %p80, %p81
    %p83 = scmp.ne.s32.totalorder %s71, %s72
    %p84 = scmp.eq.s32.totalorder %s20, 1
    %p85 = por %p83, %p84
    %p87 = scmp.ne.s32.totalorder %s72, %s86
    %p88 = scmp.eq.s32.totalorder %s20, 0
    %p89 = por %p87, %p88
    %s91 = sadd.s32 %s90, 1
    %p94 = scmp.eq.s32.totalorder %s14, 1
    %p95 = scmp.ne.s32.totalorder %s90, %s92
    %p96 = scmp.eq.s32.totalorder %s14, 0
    %p97 = por %p95, %p96
    %p98 = scmp.ne.s32.totalorder %s90, %s92
    %p99 = scmp.eq.s32.totalorder %s19, 1
    %p100 = por %p98, %p99
    %p101 = scmp.ne.s32.totalorder %s92, %s93
    %p102 = scmp.eq.s32.totalorder %s19, 0
    %p103 = por %p101, %p102
    %p104 = scmp.ne.s32.totalorder %s92, %s93
    %p105 = scmp.eq.s32.totalorder %s20, 1
    %p106 = por %p104, %p105
    %p108 = scmp.ne.s32.totalorder %s93, %s107
    %p109 = scmp.eq.s32.totalorder %s20, 0
    %p110 = por %p108, %p109
    %s112 = sadd.s32 %s111, 1
    %p115 = scmp.eq.s32.totalorder %s14, 1
    %p116 = scmp.ne.s32.totalorder %s111, %s113
    %p117 = scmp.eq.s32.totalorder %s14, 0
    %p118 = por %p116, %p117
    %p119 = scmp.ne.s32.totalorder %s111, %s113
    %p120 = scmp.eq.s32.totalorder %s19, 1
    %p121 = por %p119, %p120
    %p122 = scmp.ne.s32.totalorder %s113, %s114
    %p123 = scmp.eq.s32.totalorder %s19, 0
    %p124 = por %p122, %p123
    %p125 = scmp.ne.s32.totalorder %s113, %s114
    %p126 = scmp.eq.s32.totalorder %s20, 1
    %p127 = por %p125, %p126
    %p129 = scmp.ne.s32.totalorder %s114, %s128
    %p130 = scmp.eq.s32.totalorder %s20, 0
    %p131 = por %p129, %p130
    %s133 = sadd.s32 %s132, 1
    %p136 = scmp.eq.s32.totalorder %s14, 1
    %p137 = scmp.ne.s32.totalorder %s132, %s134
    %p138 = scmp.eq.s32.totalorder %s14, 0
    %p139 = por %p137, %p138
    %p140 = scmp.ne.s32.totalorder %s132, %s134
    %p141 = scmp.eq.s32.totalorder %s19, 1
    %p142 = por %p140, %p141
    %p143 = scmp.ne.s32.totalorder %s134, %s135
    %p144 = scmp.eq.s32.totalorder %s19, 0
    %p145 = por %p143, %p144
    %p146 = scmp.ne.s32.totalorder %s134, %s135
    %p147 = scmp.eq.s32.totalorder %s20, 1
    %p148 = por %p146, %p147
    %p150 = scmp.ne.s32.totalorder %s135, %s149
    %p151 = scmp.eq.s32.totalorder %s20, 0
    %p152 = por %p150, %p151
    %s154 = sadd.s32 %s153, 1
    %p157 = scmp.eq.s32.totalorder %s14, 1
    %p158 = scmp.ne.s32.totalorder %s153, %s155
    %p159 = scmp.eq.s32.totalorder %s14, 0
    %p160 = por %p158, %p159
    %p161 = scmp.ne.s32.totalorder %s153, %s155
    %p162 = scmp.eq.s32.totalorder %s19, 1
    %p163 = por %p161, %p162
    %p164 = scmp.ne.s32.totalorder %s155, %s156
    %p165 = scmp.eq.s32.totalorder %s19, 0
    %p166 = por %p164, %p165
    %p167 = scmp.ne.s32.totalorder %s155, %s156
    %p168 = scmp.eq.s32.totalorder %s20, 1
    %p169 = por %p167, %p168
    %p171 = scmp.ne.s32.totalorder %s156, %s170
    %p172 = scmp.eq.s32.totalorder %s20, 0
    %p173 = por %p171, %p172
    %s175 = sadd.s32 %s174, 1
    %p178 = scmp.eq.s32.totalorder %s14, 1
    %p179 = scmp.ne.s32.totalorder %s174, %s176
    %p180 = scmp.eq.s32.totalorder %s14, 0
    %p181 = por %p179, %p180
    %p182 = scmp.ne.s32.totalorder %s174, %s176
    %p183 = scmp.eq.s32.totalorder %s19, 1
    %p184 = por %p182, %p183
    %p185 = scmp.ne.s32.totalorder %s176, %s177
    %p186 = scmp.eq.s32.totalorder %s19, 0
    %p187 = por %p185, %p186
    %p188 = scmp.ne.s32.totalorder %s176, %s177
    %p189 = scmp.eq.s32.totalorder %s20, 1
    %p190 = por %p188, %p189
    %p192 = scmp.ne.s32.totalorder %s177, %s191
    %p193 = scmp.eq.s32.totalorder %s20, 0
    %p194 = por %p192, %p193
    %s195 = ssub.s32 %s14, %s21
    %p196 = scmp.eq.s32.totalorder %s195, 0
    %s198 = sadd.s32 %s197, 1
    %s199 = scalar_select %p196, %s197, %s198
    %p202 = pneg %p196
    %p203 = scmp.eq.s32.totalorder %s14, 1
    %p204 = por %p202, %p203
    %p205 = scmp.ne.s32.totalorder %s197, %s200
    %p206 = scmp.eq.s32.totalorder %s14, 0
    %p207 = por %p205, %p206
    %p208 = scmp.ne.s32.totalorder %s197, %s200
    %p209 = scmp.eq.s32.totalorder %s19, 1
    %p210 = por %p208, %p209
    %p211 = scmp.ne.s32.totalorder %s200, %s201
    %p212 = scmp.eq.s32.totalorder %s19, 0
    %p213 = por %p211, %p212
    %p214 = scmp.ne.s32.totalorder %s200, %s201
    %p215 = scmp.eq.s32.totalorder %s20, 1
    %p216 = por %p214, %p215
    %p218 = scmp.ne.s32.totalorder %s201, %s217
    %p219 = scmp.eq.s32.totalorder %s20, 0
    %p220 = por %p218, %p219
    %p221 = scmp.le.s32.totalorder 1, %s14
    %p222 = scmp.lt.s32.totalorder %s14, 3
    %p223 = pnand %p221, %p222
    %p224 = pneg %p223
    // Predicated region
    $region9: #{tpu_custom_call.1} parent=5 // pred_check
      _
    $region10: #{tpu_custom_call.1} parent=5 // pred_check_branch
      %226 = sbr.rel (%p223) target = $region12
    $region11: #{tpu_custom_call.1} parent=5 // pred_region
      %s227 = ssub.s32 %s14, 1
      // Predicated region
      $region13: #{tpu_custom_call.1} parent=11 // pred_check
        %p228 = pneg %p61
      $region14: #{tpu_custom_call.1} parent=11 // pred_check_branch
        %230 = sbr.rel (%p228) target = $region16
      $region15: #{tpu_custom_call.1} parent=11 // pred_region
        _
      $region16: #{tpu_custom_call.1} parent=11 // pred_fallthru
        _
      // Predicated region
      $region17: #{tpu_custom_call.1} parent=11 // pred_check
        %p231 = pneg %p82
      $region18: #{tpu_custom_call.1} parent=11 // pred_check_branch
        %233 = sbr.rel (%p231) target = $region20
      $region19: #{tpu_custom_call.1} parent=11 // pred_region
        _
      $region20: #{tpu_custom_call.1} parent=11 // pred_fallthru
        _
      // Predicated region
      $region21: #{tpu_custom_call.1} parent=11 // pred_check
        %p234 = pneg %p103
      $region22: #{tpu_custom_call.1} parent=11 // pred_check_branch
        %236 = sbr.rel (%p234) target = $region24
      $region23: #{tpu_custom_call.1} parent=11 // pred_region
        _
      $region24: #{tpu_custom_call.1} parent=11 // pred_fallthru
        _
      // Predicated region
      $region25: #{tpu_custom_call.1} parent=11 // pred_check
        %p237 = pneg %p124
      $region26: #{tpu_custom_call.1} parent=11 // pred_check_branch
        %239 = sbr.rel (%p237) target = $region28
      $region27: #{tpu_custom_call.1} parent=11 // pred_region
        _
      $region28: #{tpu_custom_call.1} parent=11 // pred_fallthru
        _
      // Predicated region
      $region29: #{tpu_custom_call.1} parent=11 // pred_check
        %p240 = pneg %p145
      $region30: #{tpu_custom_call.1} parent=11 // pred_check_branch
        %242 = sbr.rel (%p240) target = $region32
      $region31: #{tpu_custom_call.1} parent=11 // pred_region
        _
      $region32: #{tpu_custom_call.1} parent=11 // pred_fallthru
        _
      // Predicated region
      $region33: #{tpu_custom_call.1} parent=11 // pred_check
        %p243 = pneg %p166
      $region34: #{tpu_custom_call.1} parent=11 // pred_check_branch
        %245 = sbr.rel (%p243) target = $region36
      $region35: #{tpu_custom_call.1} parent=11 // pred_region
        _
      $region36: #{tpu_custom_call.1} parent=11 // pred_fallthru
        _
      // Predicated region
      $region37: #{tpu_custom_call.1} parent=11 // pred_check
        %p246 = pneg %p187
      $region38: #{tpu_custom_call.1} parent=11 // pred_check_branch
        %248 = sbr.rel (%p246) target = $region40
      $region39: #{tpu_custom_call.1} parent=11 // pred_region
        _
      $region40: #{tpu_custom_call.1} parent=11 // pred_fallthru
        _
    $region12: #{tpu_custom_call.1} parent=5 // pred_fallthru
      _
    %p249 = scmp.lt.s32.totalorder %s14, 2
    // Predicated region
    $region41: #{tpu_custom_call.1} parent=5 // pred_check
      %p250 = pneg %p249
    $region42: #{tpu_custom_call.1} parent=5 // pred_check_branch
      %252 = sbr.rel (%p250) target = $region44
    $region43: #{tpu_custom_call.1} parent=5 // pred_region
      // Predicated region
      $region45: #{tpu_custom_call.1} parent=43 // pred_check
        %p253 = pneg %p34
      $region46: #{tpu_custom_call.1} parent=43 // pred_check_branch
        %255 = sbr.rel (%p253) target = $region48
      $region47: #{tpu_custom_call.1} parent=43 // pred_region
        %p256 = scmp.lt.s32.totalorder %s14, 1
        %s257 = scalar_select %p256, %s14, 1
        %s258 = smul.addr %s257, 16
        %s259 = smul.addr %s258, 8
        %s260 = scalar_lea.vmem %s0, %s259
      $region48: #{tpu_custom_call.1} parent=43 // pred_fallthru
        _
    $region44: #{tpu_custom_call.1} parent=5 // pred_fallthru
      _
    %p261 = scmp.le.s32.totalorder 1, %s14
    %p262 = scmp.lt.s32.totalorder %s14, 3
    %p263 = pnand %p261, %p262
    %p264 = pneg %p263
    // Predicated region
    $region49: #{tpu_custom_call.1} parent=5 // pred_check
      _
    $region50: #{tpu_custom_call.1} parent=5 // pred_check_branch
      %266 = sbr.rel (%p263) target = $region52
    $region51: #{tpu_custom_call.1} parent=5 // pred_region
      %s267 = ssub.s32 %s14, 1
      %p268 = scmp.lt.s32.totalorder %s19, 1
      %s269 = scalar_select %p268, %s19, 1
      %s270 = smul.addr %s269, 16
      %s271 = smul.addr %s270, 8
      %s272 = scalar_lea.vmem %s0, %s271
      %p273 = pneg %p40
      %p274 = pneg %p37
      %p275 = pneg %p61
      %p276 = pneg %p58
      %p277 = pneg %p82
      %p278 = pneg %p79
      %p279 = pneg %p103
      %p280 = pneg %p100
      %p281 = pneg %p124
      %p282 = pneg %p121
      %p283 = pneg %p145
      %p284 = pneg %p142
      %p285 = pneg %p166
      %p286 = pneg %p163
      %p287 = pneg %p187
      %p288 = pneg %p184
      %p289 = pneg %p213
      %p290 = pneg %p210
      %p291 = scmp.lt.s32.totalorder %s19, 1
      %s292 = scalar_select %p291, %s19, 1
      %s293 = smul.addr %s292, 16
      %s294 = smul.addr %s293, 8
      %s295 = scalar_lea.vmem %s8, %s294
      %p296 = scmp.lt.s32.totalorder %s19, 1
      %s297 = scalar_select %p296, %s19, 1
      %s298 = smul.addr %s297, 16
      %s299 = smul.addr %s298, 8
      %s300 = scalar_lea.vmem %s0, %s299
      %p301 = scmp.lt.s32.totalorder %s19, 1
      %s302 = scalar_select %p301, %s19, 1
      %s303 = smul.addr %s302, 16
      %s304 = smul.addr %s303, 8
      %s305 = scalar_lea.vmem %s8, %s304
      %v306 = vld [vmem:[%s300] sm:$0xff]
      %v307 = vld [vmem:[%s300 + $0x8] sm:$0xff]
      %v308 = vld [vmem:[%s300 + $0x10] sm:$0xff]
      %v309 = vld [vmem:[%s300 + $0x18] sm:$0xff]
      %v310 = vld [vmem:[%s300 + $0x20] sm:$0xff]
      %v311 = vld [vmem:[%s300 + $0x28] sm:$0xff]
      %v312 = vld [vmem:[%s300 + $0x30] sm:$0xff]
      %v313 = vld [vmem:[%s300 + $0x38] sm:$0xff]
      %v314 = vld [vmem:[%s300 + $0x40] sm:$0xff]
      %v315 = vld [vmem:[%s300 + $0x48] sm:$0xff]
      %v316 = vld [vmem:[%s300 + $0x50] sm:$0xff]
      %v317 = vld [vmem:[%s300 + $0x58] sm:$0xff]
      %v318 = vld [vmem:[%s300 + $0x60] sm:$0xff]
      %v319 = vld [vmem:[%s300 + $0x68] sm:$0xff]
      %v320 = vld [vmem:[%s300 + $0x70] sm:$0xff]
      %v321 = vld [vmem:[%s300 + $0x78] sm:$0xff]
      %vm322 = vcmask 261120
      %v323 = vsel %vm322, %v306, 0.0
      %v324 = vsel %vm322, %v307, 0.0
      %v325 = vadd.f32 %v323, %v324
      %v326 = vsel %vm322, %v308, 0.0
      %v327 = vadd.f32 %v325, %v326
      %v328 = vsel %vm322, %v309, 0.0
      %v329 = vadd.f32 %v327, %v328
      %v330 = vsel %vm322, %v310, 0.0
      %v331 = vadd.f32 %v329, %v330
      %v332 = vsel %vm322, %v311, 0.0
      %v333 = vadd.f32 %v331, %v332
      %v334 = vsel %vm322, %v312, 0.0
      %v335 = vadd.f32 %v333, %v334
      %v336 = vsel %vm322, %v313, 0.0
      %v337 = vadd.f32 %v335, %v336
      %v338 = vsel %vm322, %v314, 0.0
      %v339 = vadd.f32 %v337, %v338
      %v340 = vsel %vm322, %v315, 0.0
      %v341 = vadd.f32 %v339, %v340
      %v342 = vsel %vm322, %v316, 0.0
      %v343 = vadd.f32 %v341, %v342
      %v344 = vsel %vm322, %v317, 0.0
      %v345 = vadd.f32 %v343, %v344
      %v346 = vsel %vm322, %v318, 0.0
      %v347 = vadd.f32 %v345, %v346
      %v348 = vsel %vm322, %v319, 0.0
      %v349 = vadd.f32 %v347, %v348
      %v350 = vsel %vm322, %v320, 0.0
      %v351 = vadd.f32 %v349, %v350
      %v352 = vsel %vm322, %v321, 0.0
      %v353 = vadd.f32 %v351, %v352
      %v354 = vrot.slane %v353, 4
      %v355 = vadd.f32 %v353, %v354
      %v356 = vrot.slane %v355, 2
      %v357 = vadd.f32 %v355, %v356
      %v358 = vrot.slane %v357, 1
      %v359 = vadd.f32 %v357, %v358
      %v360 = vrcp.pop 128.0
      %v361 = vmul.f32 %v359, %v360
      %v362 = vsub.f32 %v306, %v361
      %v363 = vsub.f32 %v307, %v361
      %v364 = vsub.f32 %v308, %v361
      %v365 = vsub.f32 %v309, %v361
      %v366 = vsub.f32 %v310, %v361
      %v367 = vsub.f32 %v311, %v361
      %v368 = vsub.f32 %v312, %v361
      %v369 = vsub.f32 %v313, %v361
      %v370 = vsub.f32 %v314, %v361
      %v371 = vsub.f32 %v315, %v361
      %v372 = vsub.f32 %v316, %v361
      %v373 = vsub.f32 %v317, %v361
      %v374 = vsub.f32 %v318, %v361
      %v375 = vsub.f32 %v319, %v361
      %v376 = vsub.f32 %v320, %v361
      %v377 = vsub.f32 %v321, %v361
      %v378 = vmul.f32 %v362, %v362
      %v379 = vmul.f32 %v363, %v363
      %v380 = vmul.f32 %v364, %v364
      %v381 = vmul.f32 %v365, %v365
      %v382 = vmul.f32 %v366, %v366
      %v383 = vmul.f32 %v367, %v367
      %v384 = vmul.f32 %v368, %v368
      %v385 = vmul.f32 %v369, %v369
      %v386 = vmul.f32 %v370, %v370
      %v387 = vmul.f32 %v371, %v371
      %v388 = vmul.f32 %v372, %v372
      %v389 = vmul.f32 %v373, %v373
      %v390 = vmul.f32 %v374, %v374
      %v391 = vmul.f32 %v375, %v375
      %v392 = vmul.f32 %v376, %v376
      %v393 = vmul.f32 %v377, %v377
      %v394 = vsel %vm322, %v378, 0.0
      %v395 = vsel %vm322, %v379, 0.0
      %v396 = vadd.f32 %v394, %v395
      %v397 = vsel %vm322, %v380, 0.0
      %v398 = vadd.f32 %v396, %v397
      %v399 = vsel %vm322, %v381, 0.0
      %v400 = vadd.f32 %v398, %v399
      %v401 = vsel %vm322, %v382, 0.0
      %v402 = vadd.f32 %v400, %v401
      %v403 = vsel %vm322, %v383, 0.0
      %v404 = vadd.f32 %v402, %v403
      %v405 = vsel %vm322, %v384, 0.0
      %v406 = vadd.f32 %v404, %v405
      %v407 = vsel %vm322, %v385, 0.0
      %v408 = vadd.f32 %v406, %v407
      %v409 = vsel %vm322, %v386, 0.0
      %v410 = vadd.f32 %v408, %v409
      %v411 = vsel %vm322, %v387, 0.0
      %v412 = vadd.f32 %v410, %v411
      %v413 = vsel %vm322, %v388, 0.0
      %v414 = vadd.f32 %v412, %v413
      %v415 = vsel %vm322, %v389, 0.0
      %v416 = vadd.f32 %v414, %v415
      %v417 = vsel %vm322, %v390, 0.0
      %v418 = vadd.f32 %v416, %v417
      %v419 = vsel %vm322, %v391, 0.0
      %v420 = vadd.f32 %v418, %v419
      %v421 = vsel %vm322, %v392, 0.0
      %v422 = vadd.f32 %v420, %v421
      %v423 = vsel %vm322, %v393, 0.0
      %v424 = vadd.f32 %v422, %v423
      %v425 = vrot.slane %v424, 4
      %v426 = vadd.f32 %v424, %v425
      %v427 = vrot.slane %v426, 2
      %v428 = vadd.f32 %v426, %v427
      %v429 = vrot.slane %v428, 1
      %v430 = vadd.f32 %v428, %v429
      %v431 = vmul.f32 %v430, %v360
      %v432 = vadd.f32 %v431, 0.001
      %v433 = vrsqrt.pop %v432
      %v434 = vld [vmem:[%s3] sm:$0x1]
      %v435 = vmul.f32 %v433, %v434
      %v436 = vlaneseq
      %v437 = vshrl.u32 %v436, 7
      %v438 = vsub.s32 0, %v437
      %v439 = vrot.slane %v435, %v438
      %v440 = vmul.f32 %v362, %v439
      %v441 = vmul.f32 %v363, %v439
      %v442 = vmul.f32 %v364, %v439
      %v443 = vmul.f32 %v365, %v439
      %v444 = vmul.f32 %v366, %v439
      %v445 = vmul.f32 %v367, %v439
      %v446 = vmul.f32 %v368, %v439
      %v447 = vmul.f32 %v369, %v439
      %v448 = vmul.f32 %v370, %v439
      %v449 = vmul.f32 %v371, %v439
      %v450 = vmul.f32 %v372, %v439
      %v451 = vmul.f32 %v373, %v439
      %v452 = vmul.f32 %v374, %v439
      %v453 = vmul.f32 %v375, %v439
      %v454 = vmul.f32 %v376, %v439
      %v455 = vmul.f32 %v377, %v439
      %v456 = vld [vmem:[%s4] sm:$0x1]
      %v458 = vlaneseq
      %v459 = vshrl.u32 %v458, 7
      %v460 = vsub.s32 0, %v459
      %v461 = vrot.slane %v456, %v460
      %v463 = vadd.f32 %v440, %v461
      %v464 = vadd.f32 %v441, %v461
      %v465 = vadd.f32 %v442, %v461
      %v466 = vadd.f32 %v443, %v461
      %v467 = vadd.f32 %v444, %v461
      %v468 = vadd.f32 %v445, %v461
      %v469 = vadd.f32 %v446, %v461
      %v470 = vadd.f32 %v447, %v461
      %v471 = vadd.f32 %v448, %v461
      %v472 = vadd.f32 %v449, %v461
      %v473 = vadd.f32 %v450, %v461
      %v474 = vadd.f32 %v451, %v461
      %v475 = vadd.f32 %v452, %v461
      %v476 = vadd.f32 %v453, %v461
      %v477 = vadd.f32 %v454, %v461
      %v478 = vadd.f32 %v455, %v461
      %v479 = vmax.f32 %v463, 0.0
      %v480 = vmax.f32 %v464, 0.0
      %v481 = vmax.f32 %v465, 0.0
      %v482 = vmax.f32 %v466, 0.0
      %v483 = vmax.f32 %v467, 0.0
      %v484 = vmax.f32 %v468, 0.0
      %v485 = vmax.f32 %v469, 0.0
      %v486 = vmax.f32 %v470, 0.0
      %v487 = vmax.f32 %v471, 0.0
      %v488 = vmax.f32 %v472, 0.0
      %v489 = vmax.f32 %v473, 0.0
      %v490 = vmax.f32 %v474, 0.0
      %v491 = vmax.f32 %v475, 0.0
      %v492 = vmax.f32 %v476, 0.0
      %v493 = vmax.f32 %v477, 0.0
      %v494 = vmax.f32 %v478, 0.0
      %v495 = vld [vmem:[%s1] sm:$0xff]
      %v496 = vld [vmem:[%s1 + $0x8] sm:$0xff]
      %v497 = vld [vmem:[%s1 + $0x10] sm:$0xff]
      %v498 = vld [vmem:[%s1 + $0x18] sm:$0xff]
      %v500 = vsel %vm322, %v479, 0
      %v503 = vsel %vm322, %v480, 0
      %v506 = vsel %vm322, %v481, 0
      %v509 = vsel %vm322, %v482, 0
      %v512 = vsel %vm322, %v483, 0
      %v515 = vsel %vm322, %v484, 0
      %v518 = vsel %vm322, %v485, 0
      %v521 = vsel %vm322, %v486, 0
      %v524 = vsel %vm322, %v487, 0
      %v527 = vsel %vm322, %v488, 0
      %v530 = vsel %vm322, %v489, 0
      %v533 = vsel %vm322, %v490, 0
      %v536 = vsel %vm322, %v491, 0
      %v539 = vsel %vm322, %v492, 0
      %v542 = vsel %vm322, %v493, 0
      %v545 = vsel %vm322, %v494, 0
      %547 = vmatprep.subr.mxu0 0.0
      %548 = vmatpush1.msra.mxu0 %v495
      %549 = vmatprep.subr.mxu0 0.0
      %550 = vmatpush1.msra.mxu0 %v496
      %551 = vmatprep.subr.mxu0 0.0
      %552 = vmatpush1.msra.mxu0 %v497
      %553 = vmatprep.subr.mxu0 0.0
      %554 = vmatpush1.msra.mxu0 %v498
      %555 = vmatprep.subr.mxu0 0.0
      %556 = vmatpush1.msra.mxu0 0.0
      %557 = vmatprep.subr.mxu0 0.0
      %558 = vmatpush1.msra.mxu0 0.0
      %559 = vmatprep.subr.mxu0 0.0
      %560 = vmatpush1.msra.mxu0 0.0
      %561 = vmatprep.subr.mxu0 0.0
      %562 = vmatpush1.msra.mxu0 0.0
      %563 = vmatprep.subr.mxu0 0.0
      %564 = vmatpush1.msra.mxu0 0.0
      %565 = vmatprep.subr.mxu0 0.0
      %566 = vmatpush1.msra.mxu0 0.0
      %567 = vmatprep.subr.mxu0 0.0
      %568 = vmatpush1.msra.mxu0 0.0
      %569 = vmatprep.subr.mxu0 0.0
      %570 = vmatpush1.msra.mxu0 0.0
      %571 = vmatprep.subr.mxu0 0.0
      %572 = vmatpush1.msra.mxu0 0.0
      %573 = vmatprep.subr.mxu0 0.0
      %574 = vmatpush1.msra.mxu0 0.0
      %575 = vmatprep.subr.mxu0 0.0
      %576 = vmatpush1.msra.mxu0 0.0
      %577 = vmatprep.subr.mxu0 0.0
      %578 = vmatpush1.msra.mxu0 0.0
      %579 = vmatprep.subr.mxu0 0.0
      %580 = vmatpush1.msra.mxu0 0.0
      %581 = vmatprep.subr.mxu0 0.0
      %582 = vmatpush1.msra.mxu0 0.0
      %583 = vmatprep.subr.mxu0 0.0
      %584 = vmatpush1.msra.mxu0 0.0
      %585 = vmatprep.subr.mxu0 0.0
      %586 = vmatpush1.msra.mxu0 0.0
      %587 = vmatprep.subr.mxu0 0.0
      %588 = vmatpush1.msra.mxu0 0.0
      %589 = vmatprep.subr.mxu0 0.0
      %590 = vmatpush1.msra.mxu0 0.0
      %591 = vmatprep.subr.mxu0 0.0
      %592 = vmatpush1.msra.mxu0 0.0
      %593 = vmatprep.subr.mxu0 0.0
      %594 = vmatpush1.msra.mxu0 0.0
      %595 = vmatprep.subr.mxu0 0.0
      %596 = vmatpush1.msra.mxu0 0.0
      %597 = vmatprep.subr.mxu0 0.0
      %598 = vmatpush1.msra.mxu0 0.0
      %599 = vmatprep.subr.mxu0 0.0
      %600 = vmatpush1.msra.mxu0 0.0
      %601 = vmatprep.subr.mxu0 0.0
      %602 = vmatpush1.msra.mxu0 0.0
      %603 = vmatprep.subr.mxu0 0.0
      %604 = vmatpush1.msra.mxu0 0.0
      %605 = vmatprep.subr.mxu0 0.0
      %606 = vmatpush1.msra.mxu0 0.0
      %607 = vmatprep.subr.mxu0 0.0
      %608 = vmatpush1.msra.mxu0 0.0
      %609 = vmatprep.subr.mxu0 0.0
      %610 = vmatpush1.msra.mxu0 0.0
      %611 = vmatprep.mubr.f32.mxu0 0.0
      %612 = vmatmul.mubr.f32.gmra.mrb[0].mxu0 %v500
      %v613 = vpop.f32.mrb[0].mxu0
      %v614 = vadd.f32 0.0, %v613
      %v615 = vpop.f32.mrb[0].mxu0
      %616 = vmatprep.mubr.f32.mxu0 0.0
      %617 = vmatmul.mubr.f32.gmra.mrb[0].mxu0 %v503
      %v618 = vpop.f32.mrb[0].mxu0
      %v619 = vadd.f32 0.0, %v618
      %v620 = vpop.f32.mrb[0].mxu0
      %621 = vmatprep.mubr.f32.mxu0 0.0
      %622 = vmatmul.mubr.f32.gmra.mrb[0].mxu0 %v506
      %v623 = vpop.f32.mrb[0].mxu0
      %v624 = vadd.f32 0.0, %v623
      %v625 = vpop.f32.mrb[0].mxu0
      %626 = vmatprep.mubr.f32.mxu0 0.0
      %627 = vmatmul.mubr.f32.gmra.mrb[0].mxu0 %v509
      %v628 = vpop.f32.mrb[0].mxu0
      %v629 = vadd.f32 0.0, %v628
      %v630 = vpop.f32.mrb[0].mxu0
      %631 = vmatprep.mubr.f32.mxu0 0.0
      %632 = vmatmul.mubr.f32.gmra.mrb[0].mxu0 %v512
      %v633 = vpop.f32.mrb[0].mxu0
      %v634 = vadd.f32 0.0, %v633
      %v635 = vpop.f32.mrb[0].mxu0
      %636 = vmatprep.mubr.f32.mxu0 0.0
      %637 = vmatmul.mubr.f32.gmra.mrb[0].mxu0 %v515
      %v638 = vpop.f32.mrb[0].mxu0
      %v639 = vadd.f32 0.0, %v638
      %v640 = vpop.f32.mrb[0].mxu0
      %641 = vmatprep.mubr.f32.mxu0 0.0
      %642 = vmatmul.mubr.f32.gmra.mrb[0].mxu0 %v518
      %v643 = vpop.f32.mrb[0].mxu0
      %v644 = vadd.f32 0.0, %v643
      %v645 = vpop.f32.mrb[0].mxu0
      %646 = vmatprep.mubr.f32.mxu0 0.0
      %647 = vmatmul.mubr.f32.gmra.mrb[0].mxu0 %v521
      %v648 = vpop.f32.mrb[0].mxu0
      %v649 = vadd.f32 0.0, %v648
      %v650 = vpop.f32.mrb[0].mxu0
      %651 = vmatprep.mubr.f32.mxu0 0.0
      %652 = vmatmul.mubr.f32.gmra.mrb[0].mxu0 %v524
      %v653 = vpop.f32.mrb[0].mxu0
      %v654 = vadd.f32 0.0, %v653
      %v655 = vpop.f32.mrb[0].mxu0
      %656 = vmatprep.mubr.f32.mxu0 0.0
      %657 = vmatmul.mubr.f32.gmra.mrb[0].mxu0 %v527
      %v658 = vpop.f32.mrb[0].mxu0
      %v659 = vadd.f32 0.0, %v658
      %v660 = vpop.f32.mrb[0].mxu0
      %661 = vmatprep.mubr.f32.mxu0 0.0
      %662 = vmatmul.mubr.f32.gmra.mrb[0].mxu0 %v530
      %v663 = vpop.f32.mrb[0].mxu0
      %v664 = vadd.f32 0.0, %v663
      %v665 = vpop.f32.mrb[0].mxu0
      %666 = vmatprep.mubr.f32.mxu0 0.0
      %667 = vmatmul.mubr.f32.gmra.mrb[0].mxu0 %v533
      %v668 = vpop.f32.mrb[0].mxu0
      %v669 = vadd.f32 0.0, %v668
      %v670 = vpop.f32.mrb[0].mxu0
      %671 = vmatprep.mubr.f32.mxu0 0.0
      %672 = vmatmul.mubr.f32.gmra.mrb[0].mxu0 %v536
      %v673 = vpop.f32.mrb[0].mxu0
      %v674 = vadd.f32 0.0, %v673
      %v675 = vpop.f32.mrb[0].mxu0
      %676 = vmatprep.mubr.f32.mxu0 0.0
      %677 = vmatmul.mubr.f32.gmra.mrb[0].mxu0 %v539
      %v678 = vpop.f32.mrb[0].mxu0
      %v679 = vadd.f32 0.0, %v678
      %v680 = vpop.f32.mrb[0].mxu0
      %681 = vmatprep.mubr.f32.mxu0 0.0
      %682 = vmatmul.mubr.f32.gmra.mrb[0].mxu0 %v542
      %v683 = vpop.f32.mrb[0].mxu0
      %v684 = vadd.f32 0.0, %v683
      %v685 = vpop.f32.mrb[0].mxu0
      %686 = vmatprep.mubr.f32.mxu0 0.0
      %687 = vmatmul.mubr.f32.gmra.mrb[0].mxu0 %v545
      %v688 = vpop.f32.mrb[0].mxu0
      %v689 = vadd.f32 0.0, %v688
      %v690 = vpop.f32.mrb[0].mxu0
      %691 = vdwg.mxu0
      %v692 = vsel %vm322, %v614, 0.0
      %v693 = vsel %vm322, %v619, 0.0
      %v694 = vadd.f32 %v692, %v693
      %v695 = vsel %vm322, %v624, 0.0
      %v696 = vadd.f32 %v694, %v695
      %v697 = vsel %vm322, %v629, 0.0
      %v698 = vadd.f32 %v696, %v697
      %v699 = vsel %vm322, %v634, 0.0
      %v700 = vadd.f32 %v698, %v699
      %v701 = vsel %vm322, %v639, 0.0
      %v702 = vadd.f32 %v700, %v701
      %v703 = vsel %vm322, %v644, 0.0
      %v704 = vadd.f32 %v702, %v703
      %v705 = vsel %vm322, %v649, 0.0
      %v706 = vadd.f32 %v704, %v705
      %v707 = vsel %vm322, %v654, 0.0
      %v708 = vadd.f32 %v706, %v707
      %v709 = vsel %vm322, %v659, 0.0
      %v710 = vadd.f32 %v708, %v709
      %v711 = vsel %vm322, %v664, 0.0
      %v712 = vadd.f32 %v710, %v711
      %v713 = vsel %vm322, %v669, 0.0
      %v714 = vadd.f32 %v712, %v713
      %v715 = vsel %vm322, %v674, 0.0
      %v716 = vadd.f32 %v714, %v715
      %v717 = vsel %vm322, %v679, 0.0
      %v718 = vadd.f32 %v716, %v717
      %v719 = vsel %vm322, %v684, 0.0
      %v720 = vadd.f32 %v718, %v719
      %v721 = vsel %vm322, %v689, 0.0
      %v722 = vadd.f32 %v720, %v721
      %v723 = vrot.slane %v722, 4
      %v724 = vadd.f32 %v722, %v723
      %v725 = vrot.slane %v724, 2
      %v726 = vadd.f32 %v724, %v725
      %v727 = vrot.slane %v726, 1
      %v728 = vadd.f32 %v726, %v727
      %v729 = vmul.f32 %v728, %v360
      %v730 = vsub.f32 %v614, %v729
      %v731 = vsub.f32 %v619, %v729
      %v732 = vsub.f32 %v624, %v729
      %v733 = vsub.f32 %v629, %v729
      %v734 = vsub.f32 %v634, %v729
      %v735 = vsub.f32 %v639, %v729
      %v736 = vsub.f32 %v644, %v729
      %v737 = vsub.f32 %v649, %v729
      %v738 = vsub.f32 %v654, %v729
      %v739 = vsub.f32 %v659, %v729
      %v740 = vsub.f32 %v664, %v729
      %v741 = vsub.f32 %v669, %v729
      %v742 = vsub.f32 %v674, %v729
      %v743 = vsub.f32 %v679, %v729
      %v744 = vsub.f32 %v684, %v729
      %v745 = vsub.f32 %v689, %v729
      %v746 = vmul.f32 %v730, %v730
      %v747 = vmul.f32 %v731, %v731
      %v748 = vmul.f32 %v732, %v732
      %v749 = vmul.f32 %v733, %v733
      %v750 = vmul.f32 %v734, %v734
      %v751 = vmul.f32 %v735, %v735
      %v752 = vmul.f32 %v736, %v736
      %v753 = vmul.f32 %v737, %v737
      %v754 = vmul.f32 %v738, %v738
      %v755 = vmul.f32 %v739, %v739
      %v756 = vmul.f32 %v740, %v740
      %v757 = vmul.f32 %v741, %v741
      %v758 = vmul.f32 %v742, %v742
      %v759 = vmul.f32 %v743, %v743
      %v760 = vmul.f32 %v744, %v744
      %v761 = vmul.f32 %v745, %v745
      %v762 = vsel %vm322, %v746, 0.0
      %v763 = vsel %vm322, %v747, 0.0
      %v764 = vadd.f32 %v762, %v763
      %v765 = vsel %vm322, %v748, 0.0
      %v766 = vadd.f32 %v764, %v765
      %v767 = vsel %vm322, %v749, 0.0
      %v768 = vadd.f32 %v766, %v767
      %v769 = vsel %vm322, %v750, 0.0
      %v770 = vadd.f32 %v768, %v769
      %v771 = vsel %vm322, %v751, 0.0
      %v772 = vadd.f32 %v770, %v771
      %v773 = vsel %vm322, %v752, 0.0
      %v774 = vadd.f32 %v772, %v773
      %v775 = vsel %vm322, %v753, 0.0
      %v776 = vadd.f32 %v774, %v775
      %v777 = vsel %vm322, %v754, 0.0
      %v778 = vadd.f32 %v776, %v777
      %v779 = vsel %vm322, %v755, 0.0
      %v780 = vadd.f32 %v778, %v779
      %v781 = vsel %vm322, %v756, 0.0
      %v782 = vadd.f32 %v780, %v781
      %v783 = vsel %vm322, %v757, 0.0
      %v784 = vadd.f32 %v782, %v783
      %v785 = vsel %vm322, %v758, 0.0
      %v786 = vadd.f32 %v784, %v785
      %v787 = vsel %vm322, %v759, 0.0
      %v788 = vadd.f32 %v786, %v787
      %v789 = vsel %vm322, %v760, 0.0
      %v790 = vadd.f32 %v788, %v789
      %v791 = vsel %vm322, %v761, 0.0
      %v792 = vadd.f32 %v790, %v791
      %v793 = vrot.slane %v792, 4
      %v794 = vadd.f32 %v792, %v793
      %v795 = vrot.slane %v794, 2
      %v796 = vadd.f32 %v794, %v795
      %v797 = vrot.slane %v796, 1
      %v798 = vadd.f32 %v796, %v797
      %v799 = vmul.f32 %v798, %v360
      %v800 = vadd.f32 %v799, 0.001
      %v801 = vrsqrt.pop %v800
      %v802 = vld [vmem:[%s5] sm:$0x1]
      %v803 = vmul.f32 %v801, %v802
      %v804 = vlaneseq
      %v805 = vshrl.u32 %v804, 7
      %v806 = vsub.s32 0, %v805
      %v807 = vrot.slane %v803, %v806
      %v808 = vmul.f32 %v730, %v807
      %v809 = vmul.f32 %v731, %v807
      %v810 = vmul.f32 %v732, %v807
      %v811 = vmul.f32 %v733, %v807
      %v812 = vmul.f32 %v734, %v807
      %v813 = vmul.f32 %v735, %v807
      %v814 = vmul.f32 %v736, %v807
      %v815 = vmul.f32 %v737, %v807
      %v816 = vmul.f32 %v738, %v807
      %v817 = vmul.f32 %v739, %v807
      %v818 = vmul.f32 %v740, %v807
      %v819 = vmul.f32 %v741, %v807
      %v820 = vmul.f32 %v742, %v807
      %v821 = vmul.f32 %v743, %v807
      %v822 = vmul.f32 %v744, %v807
      %v823 = vmul.f32 %v745, %v807
      %v824 = vld [vmem:[%s6] sm:$0x1]
      %v826 = vlaneseq
      %v827 = vshrl.u32 %v826, 7
      %v828 = vsub.s32 0, %v827
      %v829 = vrot.slane %v824, %v828
      %v831 = vadd.f32 %v808, %v829
      %v832 = vadd.f32 %v809, %v829
      %v833 = vadd.f32 %v810, %v829
      %v834 = vadd.f32 %v811, %v829
      %v835 = vadd.f32 %v812, %v829
      %v836 = vadd.f32 %v813, %v829
      %v837 = vadd.f32 %v814, %v829
      %v838 = vadd.f32 %v815, %v829
      %v839 = vadd.f32 %v816, %v829
      %v840 = vadd.f32 %v817, %v829
      %v841 = vadd.f32 %v818, %v829
      %v842 = vadd.f32 %v819, %v829
      %v843 = vadd.f32 %v820, %v829
      %v844 = vadd.f32 %v821, %v829
      %v845 = vadd.f32 %v822, %v829
      %v846 = vadd.f32 %v823, %v829
      %v847 = vmax.f32 %v831, 0.0
      %v848 = vmax.f32 %v832, 0.0
      %v849 = vmax.f32 %v833, 0.0
      %v850 = vmax.f32 %v834, 0.0
      %v851 = vmax.f32 %v835, 0.0
      %v852 = vmax.f32 %v836, 0.0
      %v853 = vmax.f32 %v837, 0.0
      %v854 = vmax.f32 %v838, 0.0
      %v855 = vmax.f32 %v839, 0.0
      %v856 = vmax.f32 %v840, 0.0
      %v857 = vmax.f32 %v841, 0.0
      %v858 = vmax.f32 %v842, 0.0
      %v859 = vmax.f32 %v843, 0.0
      %v860 = vmax.f32 %v844, 0.0
      %v861 = vmax.f32 %v845, 0.0
      %v862 = vmax.f32 %v846, 0.0
      %v863 = vld [vmem:[%s2] sm:$0xff]
      %v864 = vld [vmem:[%s2 + $0x8] sm:$0xff]
      %v865 = vld [vmem:[%s2 + $0x10] sm:$0xff]
      %v866 = vld [vmem:[%s2 + $0x18] sm:$0xff]
      %v867 = vld [vmem:[%s7] sm:$0x1]
      %v869 = vlaneseq
      %v870 = vshrl.u32 %v869, 7
      %v871 = vsub.s32 0, %v870
      %v872 = vrot.slane %v867, %v871
      %v875 = vsel %vm322, %v847, 0
      %v878 = vsel %vm322, %v848, 0
      %v881 = vsel %vm322, %v849, 0
      %v884 = vsel %vm322, %v850, 0
      %v887 = vsel %vm322, %v851, 0
      %v890 = vsel %vm322, %v852, 0
      %v893 = vsel %vm322, %v853, 0
      %v896 = vsel %vm322, %v854, 0
      %v899 = vsel %vm322, %v855, 0
      %v902 = vsel %vm322, %v856, 0
      %v905 = vsel %vm322, %v857, 0
      %v908 = vsel %vm322, %v858, 0
      %v911 = vsel %vm322, %v859, 0
      %v914 = vsel %vm322, %v860, 0
      %v917 = vsel %vm322, %v861, 0
      %v920 = vsel %vm322, %v862, 0
      %922 = vmatprep.subr.mxu0 0.0
      %923 = vmatpush1.msra.mxu0 %v863
      %924 = vmatprep.subr.mxu0 0.0
      %925 = vmatpush1.msra.mxu0 %v864
      %926 = vmatprep.subr.mxu0 0.0
      %927 = vmatpush1.msra.mxu0 %v865
      %928 = vmatprep.subr.mxu0 0.0
      %929 = vmatpush1.msra.mxu0 %v866
      %930 = vmatprep.subr.mxu0 0.0
      %931 = vmatpush1.msra.mxu0 0.0
      %932 = vmatprep.subr.mxu0 0.0
      %933 = vmatpush1.msra.mxu0 0.0
      %934 = vmatprep.subr.mxu0 0.0
      %935 = vmatpush1.msra.mxu0 0.0
      %936 = vmatprep.subr.mxu0 0.0
      %937 = vmatpush1.msra.mxu0 0.0
      %938 = vmatprep.subr.mxu0 0.0
      %939 = vmatpush1.msra.mxu0 0.0
      %940 = vmatprep.subr.mxu0 0.0
      %941 = vmatpush1.msra.mxu0 0.0
      %942 = vmatprep.subr.mxu0 0.0
      %943 = vmatpush1.msra.mxu0 0.0
      %944 = vmatprep.subr.mxu0 0.0
      %945 = vmatpush1.msra.mxu0 0.0
      %946 = vmatprep.subr.mxu0 0.0
      %947 = vmatpush1.msra.mxu0 0.0
      %948 = vmatprep.subr.mxu0 0.0
      %949 = vmatpush1.msra.mxu0 0.0
      %950 = vmatprep.subr.mxu0 0.0
      %951 = vmatpush1.msra.mxu0 0.0
      %952 = vmatprep.subr.mxu0 0.0
      %953 = vmatpush1.msra.mxu0 0.0
      %954 = vmatprep.subr.mxu0 0.0
      %955 = vmatpush1.msra.mxu0 0.0
      %956 = vmatprep.subr.mxu0 0.0
      %957 = vmatpush1.msra.mxu0 0.0
      %958 = vmatprep.subr.mxu0 0.0
      %959 = vmatpush1.msra.mxu0 0.0
      %960 = vmatprep.subr.mxu0 0.0
      %961 = vmatpush1.msra.mxu0 0.0
      %962 = vmatprep.subr.mxu0 0.0
      %963 = vmatpush1.msra.mxu0 0.0
      %964 = vmatprep.subr.mxu0 0.0
      %965 = vmatpush1.msra.mxu0 0.0
      %966 = vmatprep.subr.mxu0 0.0
      %967 = vmatpush1.msra.mxu0 0.0
      %968 = vmatprep.subr.mxu0 0.0
      %969 = vmatpush1.msra.mxu0 0.0
      %970 = vmatprep.subr.mxu0 0.0
      %971 = vmatpush1.msra.mxu0 0.0
      %972 = vmatprep.subr.mxu0 0.0
      %973 = vmatpush1.msra.mxu0 0.0
      %974 = vmatprep.subr.mxu0 0.0
      %975 = vmatpush1.msra.mxu0 0.0
      %976 = vmatprep.subr.mxu0 0.0
      %977 = vmatpush1.msra.mxu0 0.0
      %978 = vmatprep.subr.mxu0 0.0
      %979 = vmatpush1.msra.mxu0 0.0
      %980 = vmatprep.subr.mxu0 0.0
      %981 = vmatpush1.msra.mxu0 0.0
      %982 = vmatprep.subr.mxu0 0.0
      %983 = vmatpush1.msra.mxu0 0.0
      %984 = vmatprep.subr.mxu0 0.0
      %985 = vmatpush1.msra.mxu0 0.0
      %986 = vmatprep.mubr.f32.mxu0 0.0
      %987 = vmatmul.mubr.f32.gmra.mrb[0].mxu0 %v875
      %v988 = vpop.f32.mrb[0].mxu0
      %v989 = vadd.f32 %v872, %v988
      %v990 = vpop.f32.mrb[0].mxu0
      %991 = vmatprep.mubr.f32.mxu0 0.0
      %992 = vmatmul.mubr.f32.gmra.mrb[0].mxu0 %v878
      %v993 = vpop.f32.mrb[0].mxu0
      %v994 = vadd.f32 %v872, %v993
      %v995 = vpop.f32.mrb[0].mxu0
      %996 = vmatprep.mubr.f32.mxu0 0.0
      %997 = vmatmul.mubr.f32.gmra.mrb[0].mxu0 %v881
      %v998 = vpop.f32.mrb[0].mxu0
      %v999 = vadd.f32 %v872, %v998
      %v1000 = vpop.f32.mrb[0].mxu0
      %1001 = vmatprep.mubr.f32.mxu0 0.0
      %1002 = vmatmul.mubr.f32.gmra.mrb[0].mxu0 %v884
      %v1003 = vpop.f32.mrb[0].mxu0
      %v1004 = vadd.f32 %v872, %v1003
      %v1005 = vpop.f32.mrb[0].mxu0
      %1006 = vmatprep.mubr.f32.mxu0 0.0
      %1007 = vmatmul.mubr.f32.gmra.mrb[0].mxu0 %v887
      %v1008 = vpop.f32.mrb[0].mxu0
      %v1009 = vadd.f32 %v872, %v1008
      %v1010 = vpop.f32.mrb[0].mxu0
      %1011 = vmatprep.mubr.f32.mxu0 0.0
      %1012 = vmatmul.mubr.f32.gmra.mrb[0].mxu0 %v890
      %v1013 = vpop.f32.mrb[0].mxu0
      %v1014 = vadd.f32 %v872, %v1013
      %v1015 = vpop.f32.mrb[0].mxu0
      %1016 = vmatprep.mubr.f32.mxu0 0.0
      %1017 = vmatmul.mubr.f32.gmra.mrb[0].mxu0 %v893
      %v1018 = vpop.f32.mrb[0].mxu0
      %v1019 = vadd.f32 %v872, %v1018
      %v1020 = vpop.f32.mrb[0].mxu0
      %1021 = vmatprep.mubr.f32.mxu0 0.0
      %1022 = vmatmul.mubr.f32.gmra.mrb[0].mxu0 %v896
      %v1023 = vpop.f32.mrb[0].mxu0
      %v1024 = vadd.f32 %v872, %v1023
      %v1025 = vpop.f32.mrb[0].mxu0
      %1026 = vmatprep.mubr.f32.mxu0 0.0
      %1027 = vmatmul.mubr.f32.gmra.mrb[0].mxu0 %v899
      %v1028 = vpop.f32.mrb[0].mxu0
      %v1029 = vadd.f32 %v872, %v1028
      %v1030 = vpop.f32.mrb[0].mxu0
      %1031 = vmatprep.mubr.f32.mxu0 0.0
      %1032 = vmatmul.mubr.f32.gmra.mrb[0].mxu0 %v902
      %v1033 = vpop.f32.mrb[0].mxu0
      %v1034 = vadd.f32 %v872, %v1033
      %v1035 = vpop.f32.mrb[0].mxu0
      %1036 = vmatprep.mubr.f32.mxu0 0.0
      %1037 = vmatmul.mubr.f32.gmra.mrb[0].mxu0 %v905
      %v1038 = vpop.f32.mrb[0].mxu0
      %v1039 = vadd.f32 %v872, %v1038
      %v1040 = vpop.f32.mrb[0].mxu0
      %1041 = vmatprep.mubr.f32.mxu0 0.0
      %1042 = vmatmul.mubr.f32.gmra.mrb[0].mxu0 %v908
      %v1043 = vpop.f32.mrb[0].mxu0
      %v1044 = vadd.f32 %v872, %v1043
      %v1045 = vpop.f32.mrb[0].mxu0
      %1046 = vmatprep.mubr.f32.mxu0 0.0
      %1047 = vmatmul.mubr.f32.gmra.mrb[0].mxu0 %v911
      %v1048 = vpop.f32.mrb[0].mxu0
      %v1049 = vadd.f32 %v872, %v1048
      %v1050 = vpop.f32.mrb[0].mxu0
      %1051 = vmatprep.mubr.f32.mxu0 0.0
      %1052 = vmatmul.mubr.f32.gmra.mrb[0].mxu0 %v914
      %v1053 = vpop.f32.mrb[0].mxu0
      %v1054 = vadd.f32 %v872, %v1053
      %v1055 = vpop.f32.mrb[0].mxu0
      %1056 = vmatprep.mubr.f32.mxu0 0.0
      %1057 = vmatmul.mubr.f32.gmra.mrb[0].mxu0 %v917
      %v1058 = vpop.f32.mrb[0].mxu0
      %v1059 = vadd.f32 %v872, %v1058
      %v1060 = vpop.f32.mrb[0].mxu0
      %1061 = vmatprep.mubr.f32.mxu0 0.0
      %1062 = vmatmul.mubr.f32.gmra.mrb[0].mxu0 %v920
      %v1063 = vpop.f32.mrb[0].mxu0
      %v1064 = vadd.f32 %v872, %v1063
      %v1065 = vpop.f32.mrb[0].mxu0
      %1066 = vdwg.mxu0
      %v1067 = vadd.f32 %v989, %v306
      %v1068 = vadd.f32 %v994, %v307
      %v1069 = vadd.f32 %v999, %v308
      %v1070 = vadd.f32 %v1004, %v309
      %v1071 = vadd.f32 %v1009, %v310
      %v1072 = vadd.f32 %v1014, %v311
      %v1073 = vadd.f32 %v1019, %v312
      %v1074 = vadd.f32 %v1024, %v313
      %v1075 = vadd.f32 %v1029, %v314
      %v1076 = vadd.f32 %v1034, %v315
      %v1077 = vadd.f32 %v1039, %v316
      %v1078 = vadd.f32 %v1044, %v317
      %v1079 = vadd.f32 %v1049, %v318
      %v1080 = vadd.f32 %v1054, %v319
      %v1081 = vadd.f32 %v1059, %v320
      %v1082 = vadd.f32 %v1064, %v321
      %1083 = vst.msk [vmem:[%s305] sm:$0xff] %vm322, %v1067
      %1084 = vst.msk [vmem:[%s305 + $0x8] sm:$0xff] %vm322, %v1068
      %1085 = vst.msk [vmem:[%s305 + $0x10] sm:$0xff] %vm322, %v1069
      %1086 = vst.msk [vmem:[%s305 + $0x18] sm:$0xff] %vm322, %v1070
      %1087 = vst.msk [vmem:[%s305 + $0x20] sm:$0xff] %vm322, %v1071
      %1088 = vst.msk [vmem:[%s305 + $0x28] sm:$0xff] %vm322, %v1072
      %1089 = vst.msk [vmem:[%s305 + $0x30] sm:$0xff] %vm322, %v1073
      %1090 = vst.msk [vmem:[%s305 + $0x38] sm:$0xff] %vm322, %v1074
      %1091 = vst.msk [vmem:[%s305 + $0x40] sm:$0xff] %vm322, %v1075
      %1092 = vst.msk [vmem:[%s305 + $0x48] sm:$0xff] %vm322, %v1076
      %1093 = vst.msk [vmem:[%s305 + $0x50] sm:$0xff] %vm322, %v1077
      %1094 = vst.msk [vmem:[%s305 + $0x58] sm:$0xff] %vm322, %v1078
      %1095 = vst.msk [vmem:[%s305 + $0x60] sm:$0xff] %vm322, %v1079
      %1096 = vst.msk [vmem:[%s305 + $0x68] sm:$0xff] %vm322, %v1080
      %1097 = vst.msk [vmem:[%s305 + $0x70] sm:$0xff] %vm322, %v1081
      %1098 = vst.msk [vmem:[%s305 + $0x78] sm:$0xff] %vm322, %v1082
      %p1099 = scmp.lt.s32.totalorder %s19, 1
      %s1100 = scalar_select %p1099, %s19, 1
      %s1101 = smul.addr %s1100, 16
      %s1102 = smul.addr %s1101, 8
      %s1103 = scalar_lea.vmem %s8, %s1102
      // Predicated region
      $region53: #{tpu_custom_call.1} parent=51 // pred_check
        %p1104 = pneg %p210
      $region54: #{tpu_custom_call.1} parent=51 // pred_check_branch
        %1106 = sbr.rel (%p1104) target = $region56
      $region55: #{tpu_custom_call.1} parent=51 // pred_region
        _
      $region56: #{tpu_custom_call.1} parent=51 // pred_fallthru
        _
    $region52: #{tpu_custom_call.1} parent=5 // pred_fallthru
      _
    %p1107 = scmp.le.s32.totalorder 2, %s14
    // Predicated region
    $region57: #{tpu_custom_call.1} parent=5 // pred_check
      %p1108 = pneg %p1107
    $region58: #{tpu_custom_call.1} parent=5 // pred_check_branch
      %1110 = sbr.rel (%p1108) target = $region60
    $region59: #{tpu_custom_call.1} parent=5 // pred_region
      %s1111 = ssub.s32 %s14, 2
      // Predicated region
      $region61: #{tpu_custom_call.1} parent=59 // pred_check
        %p1112 = pneg %p216
      $region62: #{tpu_custom_call.1} parent=59 // pred_check_branch
        %1114 = sbr.rel (%p1112) target = $region64
      $region63: #{tpu_custom_call.1} parent=59 // pred_region
        %p1115 = scmp.lt.s32.totalorder %s20, 1
        %s1116 = scalar_select %p1115, %s20, 1
        %s1117 = smul.addr %s1116, 16
        %s1118 = smul.addr %s1117, 8
        %s1119 = scalar_lea.vmem %s8, %s1118
      $region64: #{tpu_custom_call.1} parent=59 // pred_fallthru
        _
    $region60: #{tpu_custom_call.1} parent=5 // pred_fallthru
      _
  $region6: #{tpu_custom_call.1} parent=0 // loop_footer
    %s18 = sadd.s32 1, %s14
  $region7: #{tpu_custom_call.1} parent=0 // loop_footer_branch
    %13 = sbr.rel target = $region3
  $region8: #{tpu_custom_call.1} parent=0 // loop_exit
    _

</llo_original>
